<compile_context>
chip_gen: v7x
topology: tpu7x:2x2x1
jax: 0.10.0
libtpu: 0.0.40
codegen_flags: <defaults>
</compile_context>

<pallas_src>
import functools

import jax
import jax.numpy as jnp
from jax import lax
from jax.experimental import pallas as pl
from jax.experimental.pallas import tpu as pltpu

_EPS2 = 1e-24  # (1e-12)^2 -> matches torch.nn.functional.normalize eps


def _round_up(x, m):
    return (x + m - 1) // m * m


def _cdiv(a, b):
    return -(-a // b)


# --------------------------------------------------------------------------
# Pre-pass (only when n_tiles > 1): L2-normalize the negatives once, emit bf16
# MXU operands plus the column-sum of the normalized negatives (used for the
# per-row negative-cosine sum: sum_j q.nk_j = q.colsum).
# --------------------------------------------------------------------------
def _normalize_negatives_kernel(x_ref, o_ref, colsum_ref):
    x = x_ref[...].astype(jnp.float32)
    ssq = jnp.sum(x * x, axis=-1, keepdims=True)
    xn = x * lax.rsqrt(jnp.maximum(ssq, _EPS2))
    o_ref[...] = xn.astype(o_ref.dtype)

    @pl.when(pl.program_id(0) == 0)
    def _():
        colsum_ref[...] = jnp.zeros_like(colsum_ref)

    # Zero-padded rows normalize to exactly zero -> no row mask needed.
    colsum_ref[...] += jnp.sum(xn, axis=0, keepdims=True)


# --------------------------------------------------------------------------
# Shared helpers for the main kernels.
# --------------------------------------------------------------------------
def _init_query_state(q_ref, p_ref, qs_scr, pos_scr, m_scr, l_scr, inv_t):
    q = q_ref[...].astype(jnp.float32)
    p = p_ref[...].astype(jnp.float32)
    qn = q * lax.rsqrt(jnp.maximum(jnp.sum(q * q, axis=-1, keepdims=True), _EPS2))
    pn = p * lax.rsqrt(jnp.maximum(jnp.sum(p * p, axis=-1, keepdims=True), _EPS2))
    pos = jnp.sum(qn * pn, axis=-1, keepdims=True)      # unscaled positive cosine
    pos_scr[...] = pos
    qs_scr[...] = (qn * inv_t).astype(jnp.bfloat16)     # temperature folded in once
    m_scr[...] = pos * inv_t                            # lse starts at pos logit
    l_scr[...] = jnp.ones_like(l_scr)                   # exp(pos_l - pos_l)
    return qn


def _online_lse_update(neg_l, m_scr, l_scr):
    m_prev = m_scr[...]
    m_new = jnp.maximum(m_prev, jnp.max(neg_l, axis=-1, keepdims=True))
    alpha = jnp.exp(m_prev - m_new)
    l_scr[...] = alpha * l_scr[...] + jnp.sum(jnp.exp(neg_l - m_new),
                                              axis=-1, keepdims=True)
    m_scr[...] = m_new


def _masked_lse_update(neg_l, m_scr, l_scr, *, TM, tail_valid, needs_mask, j):
    # Padding only exists in the last M tile; full tiles skip the mask entirely.
    if not needs_mask:
        _online_lse_update(neg_l, m_scr, l_scr)
        return
    last = pl.num_programs(1) - 1

    @pl.when(j != last)
    def _():
        _online_lse_update(neg_l, m_scr, l_scr)

    @pl.when(j == last)
    def _():
        col = lax.broadcasted_iota(jnp.int32, (1, TM), 1)
        _online_lse_update(jnp.where(col < tail_valid, neg_l, -jnp.inf),
                           m_scr, l_scr)


# --------------------------------------------------------------------------
# Main kernel A (n_tiles > 1): negatives already normalized (bf16) by pre-pass.
# --------------------------------------------------------------------------
def _infonce_prenorm_kernel(q_ref, p_ref, nk_ref, colsum_ref,
                            loss_ref, pos_ref, negsum_ref,
                            qs_scr, pos_scr, ns_scr, m_scr, l_scr,
                            *, inv_t, TM, tail_valid, needs_mask):
    j = pl.program_id(1)

    @pl.when(j == 0)
    def _init():
        qn = _init_query_state(q_ref, p_ref, qs_scr, pos_scr, m_scr, l_scr, inv_t)
        # Row-sum of unscaled negative cosines in one (TN,D) multiply-reduce.
        ns_scr[...] = jnp.sum(qn * colsum_ref[...], axis=-1, keepdims=True)

    # Scaled negative logits for this tile: bf16 x bf16 on the MXU, f32 acc,
    # contraction over the last dims of both operands (no transpose of nk).
    neg_l = lax.dot_general(qs_scr[...], nk_ref[...],
                            dimension_numbers=(((1,), (1,)), ((), ())),
                            preferred_element_type=jnp.float32)
    _masked_lse_update(neg_l, m_scr, l_scr,
                       TM=TM, tail_valid=tail_valid, needs_mask=needs_mask, j=j)

    @pl.when(j == pl.num_programs(1) - 1)
    def _finalize():
        loss_ref[...] = m_scr[...] + jnp.log(l_scr[...]) - pos_scr[...] * inv_t
        pos_ref[...] = pos_scr[...]
        negsum_ref[...] = ns_scr[...]


# --------------------------------------------------------------------------
# Main kernel B (n_tiles == 1): fused path, normalizes negatives in-kernel.
# --------------------------------------------------------------------------
def _infonce_fused_kernel(q_ref, p_ref, nk_ref,
                          loss_ref, pos_ref, negsum_ref,
                          qs_scr, pos_scr, m_scr, l_scr, colsum_scr,
                          *, inv_t, temperature, TM, tail_valid, needs_mask):
    j = pl.program_id(1)

    @pl.when(j == 0)
    def _init():
        _init_query_state(q_ref, p_ref, qs_scr, pos_scr, m_scr, l_scr, inv_t)
        colsum_scr[...] = jnp.zeros_like(colsum_scr)

    # Normalize this negatives tile in-kernel (single N tile -> nothing for a
    # pre-pass to amortize; saves a full HBM round trip over the negatives).
    nk = nk_ref[...].astype(jnp.float32)
    nkn = nk * lax.rsqrt(jnp.maximum(jnp.sum(nk * nk, axis=-1, keepdims=True),
                                     _EPS2))
    colsum_scr[...] += jnp.sum(nkn, axis=0, keepdims=True)

    neg_l = lax.dot_general(qs_scr[...], nkn.astype(jnp.bfloat16),
                            dimension_numbers=(((1,), (1,)), ((), ())),
                            preferred_element_type=jnp.float32)
    _masked_lse_update(neg_l, m_scr, l_scr,
                       TM=TM, tail_valid=tail_valid, needs_mask=needs_mask, j=j)

    @pl.when(j == pl.num_programs(1) - 1)
    def _finalize():
        loss_ref[...] = m_scr[...] + jnp.log(l_scr[...]) - pos_scr[...] * inv_t
        pos_ref[...] = pos_scr[...]
        # sum_j q.nk_j = q.(sum_j nk_j); undo the folded 1/temperature.
        qsf = qs_scr[...].astype(jnp.float32)
        negsum_ref[...] = jnp.sum(qsf * colsum_scr[...], axis=-1,
                                  keepdims=True) * temperature


# --------------------------------------------------------------------------
# Wrapper
# --------------------------------------------------------------------------
@functools.partial(jax.jit, static_argnames=("temperature",))
def info_nce_pallas(query, positive_key, negative_keys, temperature=0.1):
    """InfoNCE ('unpaired' negatives, 'mean' reduction).

    Returns (loss, mean(positive_logit), mean(negative_logits)), matching the
    reference PyTorch module's forward.
    """
    N, D = query.shape
    M, _ = negative_keys.shape
    f32 = jnp.float32

    # ---- tile selection --------------------------------------------------
    # Large tiles amortize per-grid-step overhead on v5e/v6e (128 MiB VMEM);
    # the byte budget keeps the same choices valid on v7x (64 MiB physical,
    # 32 MiB default scoped) with double-buffering intact.
    MAX_TN, MAX_TM = 512, 2048
    VMEM_BUDGET = 24 * 1024 * 1024

    q_bytes = jnp.dtype(query.dtype).itemsize
    nk_in_bytes = jnp.dtype(negative_keys.dtype).itemsize

    N8 = _round_up(N, 8)
    # Split the N ("parallel") axis in two when it is big enough so both v7x
    # TensorCores get work; on 1-TC chips it is just one extra sequential tile.
    n_splits = max(_cdiv(N8, MAX_TN), 2 if N8 >= 256 else 1)
    TN = _round_up(_cdiv(N8, n_splits), 8)
    while TN > 128 and TN * D * (4 * q_bytes + 2) > VMEM_BUDGET // 2:
        TN = _round_up(TN // 2, 8)
    N_pad = _round_up(N8, TN)
    n_tiles = N_pad // TN

    # Pre-pass only pays off when negatives are streamed more than once.
    use_prepass = n_tiles > 1
    nk_main_bytes = 2 if use_prepass else nk_in_bytes
    nk_stream_bytes = (nk_in_bytes + 2) if use_prepass else nk_in_bytes

    M8 = _round_up(M, 8)
    m_splits = max(_cdiv(M8, MAX_TM), 1)
    TM = _round_up(_cdiv(M8, m_splits), 8)
    while TM > 512 and 2 * TM * D * nk_stream_bytes > VMEM_BUDGET // 2:
        TM = _round_up(TM // 2, 8)
    M_pad = _round_up(M8, TM)
    m_tiles = M_pad // TM

    needs_mask = (M_pad != M)
    tail_valid = M - (m_tiles - 1) * TM

    # Zero-pad to tile multiples (zero rows normalize to exactly zero -> they
    # add nothing to colsum and are masked out of the logsumexp on the tail).
    q = jnp.pad(query, ((0, N_pad - N), (0, 0)))
    p = jnp.pad(positive_key, ((0, N_pad - N), (0, 0)))
    nk = jnp.pad(negative_keys, ((0, M_pad - M), (0, 0)))

    # Rough per-step VMEM need (double-buffered inputs + scratch).
    vmem_est = (4 * TN * D * q_bytes + 2 * TM * D * nk_main_bytes
                + TN * D * 2 + 16 * TN * 4 + 8 * D * 4)
    vmem_limit = int(min(64 * 1024 * 1024,
                         max(32 * 1024 * 1024, 2 * vmem_est)))

    if use_prepass:
        nk_n, colsum = pl.pallas_call(
            _normalize_negatives_kernel,
            out_shape=(jax.ShapeDtypeStruct((M_pad, D), jnp.bfloat16),
                       jax.ShapeDtypeStruct((1, D), f32)),
            grid_spec=pltpu.PrefetchScalarGridSpec(
                num_scalar_prefetch=0,
                grid=(m_tiles,),
                in_specs=[pl.BlockSpec((TM, D), lambda j: (j, 0))],
                out_specs=(pl.BlockSpec((TM, D), lambda j: (j, 0)),
                           pl.BlockSpec((1, D), lambda j: (0, 0))),
            ),
            # colsum accumulates across the grid -> reduction axis.
            compiler_params=pltpu.CompilerParams(
                dimension_semantics=("arbitrary",),
                vmem_limit_bytes=vmem_limit,
            ),
            cost_estimate=pl.CostEstimate(
                flops=5 * M_pad * D, transcendentals=M_pad,
                bytes_accessed=(nk_in_bytes + 2) * M_pad * D),
        )(nk)

        kernel = functools.partial(
            _infonce_prenorm_kernel, inv_t=1.0 / float(temperature),
            TM=TM, tail_valid=tail_valid, needs_mask=needs_mask)
        in_specs = [
            pl.BlockSpec((TN, D), lambda i, j: (i, 0)),
            pl.BlockSpec((TN, D), lambda i, j: (i, 0)),
            # When m_tiles == 1 this block index is constant across N tiles, so
            # the normalized bf16 negatives are DMA'd once and stay resident.
            pl.BlockSpec((TM, D), lambda i, j: (j, 0)),
            pl.BlockSpec((1, D), lambda i, j: (0, 0)),
        ]
        inputs = (q, p, nk_n, colsum)
        scratch_shapes = [
            pltpu.VMEM((TN, D), jnp.bfloat16),  # normalized, /t query (MXU operand)
            pltpu.VMEM((TN, 1), f32),           # positive cosine
            pltpu.VMEM((TN, 1), f32),           # per-row negative-cosine sum
            pltpu.VMEM((TN, 1), f32),           # running max
            pltpu.VMEM((TN, 1), f32),           # running sum-exp
        ]
    else:
        kernel = functools.partial(
            _infonce_fused_kernel, inv_t=1.0 / float(temperature),
            temperature=float(temperature),
            TM=TM, tail_valid=tail_valid, needs_mask=needs_mask)
        in_specs = [
            pl.BlockSpec((TN, D), lambda i, j: (i, 0)),
            pl.BlockSpec((TN, D), lambda i, j: (i, 0)),
            pl.BlockSpec((TM, D), lambda i, j: (j, 0)),
        ]
        inputs = (q, p, nk)
        scratch_shapes = [
            pltpu.VMEM((TN, D), jnp.bfloat16),  # normalized, /t query
            pltpu.VMEM((TN, 1), f32),           # positive cosine
            pltpu.VMEM((TN, 1), f32),           # running max
            pltpu.VMEM((TN, 1), f32),           # running sum-exp
            pltpu.VMEM((1, D), f32),            # colsum of normalized negatives
        ]

    out_shapes = (
        jax.ShapeDtypeStruct((N_pad, 1), f32),   # per-sample CE loss
        jax.ShapeDtypeStruct((N_pad, 1), f32),   # per-sample positive cosine
        jax.ShapeDtypeStruct((N_pad, 1), f32),   # per-row sum of negative cosines
    )
    out_specs = (
        pl.BlockSpec((TN, 1), lambda i, j: (i, 0)),
        pl.BlockSpec((TN, 1), lambda i, j: (i, 0)),
        pl.BlockSpec((TN, 1), lambda i, j: (i, 0)),
    )

    per_loss, pos_col, negsum = pl.pallas_call(
        kernel,
        out_shape=out_shapes,
        grid_spec=pltpu.PrefetchScalarGridSpec(
            num_scalar_prefetch=0,
            grid=(n_tiles, m_tiles),
            in_specs=in_specs,
            out_specs=out_specs,
            scratch_shapes=scratch_shapes,
        ),
        compiler_params=pltpu.CompilerParams(
            dimension_semantics=("parallel", "arbitrary"),
            vmem_limit_bytes=vmem_limit,
        ),
        cost_estimate=pl.CostEstimate(
            flops=2 * N_pad * M_pad * D + 12 * N_pad * D + 4 * N_pad * M_pad,
            transcendentals=N_pad * M_pad + 4 * N_pad,
            bytes_accessed=(n_tiles * M_pad * D * nk_main_bytes
                            + 2 * N_pad * D * q_bytes + 12 * N_pad),
        ),
    )(*inputs)

    # Tiny final reductions (discard padded query rows).
    loss = jnp.sum(per_loss[:N, 0]) / N           # 'mean' reduction over samples
    pmean = jnp.mean(pos_col[:N, 0])
    nmean = jnp.sum(negsum[:N, 0]) / (N * M)
    return loss, pmean, nmean


# --------------------------------------------------------------------------
# Pure-JAX reference (mirrors the PyTorch semantics: unpaired, mean).
# --------------------------------------------------------------------------
def _info_nce_ref(query, positive_key, negative_keys, temperature=0.1):
    def norm(x):
        return x / jnp.maximum(jnp.linalg.norm(x, axis=-1, keepdims=True), 1e-12)
    q, p, nk = norm(query), norm(positive_key), norm(negative_keys)
    pos = jnp.sum(q * p, axis=1, keepdims=True)
    neg = q @ nk.T
    logits = jnp.concatenate([pos, neg], axis=1) / temperature
    lse = jax.scipy.special.logsumexp(logits, axis=-1)
    loss = jnp.mean(lse - logits[:, 0])
    return loss, jnp.mean(pos), jnp.mean(neg)


def _check(out, ref):
    for o, r in zip(out, ref):
        # bf16 MXU operands -> relaxed tolerance (accumulation stays f32).
        assert jnp.allclose(o, r, atol=2e-2, rtol=2e-2), (o, r)


if __name__ == "__main__":
    base = jax.random.PRNGKey(0)

    # Case 1: tiny shapes matching the module example scale (fused path,
    # single tiles, no padding/masking).
    k1, k2, k3, k4, k5, k6, k7, k8, k9 = jax.random.split(base, 9)
    N, M, D = 8, 16, 32
    q1 = jax.random.normal(k1, (N, D), dtype=jnp.float32)
    p1 = jax.random.normal(k2, (N, D), dtype=jnp.float32)
    n1 = jax.random.normal(k3, (M, D), dtype=jnp.float32)
    out1 = jax.block_until_ready(info_nce_pallas(q1, p1, n1, temperature=0.1))
    _check(out1, _info_nce_ref(q1, p1, n1, temperature=0.1))

    # Case 2: fused path with multiple M tiles + tail-column masking
    # (exercises the online logsumexp and in-kernel negative normalization).
    N2, M2, D2 = 24, 2500, 64
    q2 = jax.random.normal(k4, (N2, D2), dtype=jnp.float32)
    p2 = jax.random.normal(k5, (N2, D2), dtype=jnp.float32)
    n2 = jax.random.normal(k6, (M2, D2), dtype=jnp.float32)
    out2 = jax.block_until_ready(info_nce_pallas(q2, p2, n2, temperature=0.1))
    _check(out2, _info_nce_ref(q2, p2, n2, temperature=0.1))

    # Case 3: multi-N-tile path (dual-TensorCore split) -> pre-pass kernel,
    # resident negatives (single M tile) + tail masking.
    N3, M3, D3 = 300, 700, 128
    q3 = jax.random.normal(k7, (N3, D3), dtype=jnp.float32)
    p3 = jax.random.normal(k8, (N3, D3), dtype=jnp.float32)
    n3 = jax.random.normal(k9, (M3, D3), dtype=jnp.float32)
    out3 = jax.block_until_ready(info_nce_pallas(q3, p3, n3, temperature=0.1))
    _check(out3, _info_nce_ref(q3, p3, n3, temperature=0.1))

    print("KERNEL_OK")
</pallas_src>

<mosaic_0001>
module attributes {stable_mosaic.version = 11 : i64} {
  func.func @_infonce_fused_kernel(%arg0: i32, %arg1: i32, %arg2: memref<8x32xf32, #tpu.memory_space<vmem>>, %arg3: memref<8x32xf32, #tpu.memory_space<vmem>>, %arg4: memref<16x32xf32, #tpu.memory_space<vmem>>, %arg5: memref<8x1xf32, #tpu.memory_space<vmem>>, %arg6: memref<8x1xf32, #tpu.memory_space<vmem>>, %arg7: memref<8x1xf32, #tpu.memory_space<vmem>>, %arg8: memref<8x32xbf16, #tpu.memory_space<vmem>>, %arg9: memref<8x1xf32, #tpu.memory_space<vmem>>, %arg10: memref<8x1xf32, #tpu.memory_space<vmem>>, %arg11: memref<8x1xf32, #tpu.memory_space<vmem>>, %arg12: memref<1x32xf32, #tpu.memory_space<vmem>>) attributes {dimension_semantics = [#tpu.dimension_semantics<parallel>, #tpu.dimension_semantics<arbitrary>], iteration_bounds = array<i64: 1, 1>, scalar_prefetch = 0 : i64, scratch_operands = 5 : i64, tpu.core_type = #tpu.core_type<tc>, window_params = [{transform_indices = @transform_0, window_bounds = array<i64: 8, 32>}, {transform_indices = @transform_1, window_bounds = array<i64: 8, 32>}, {transform_indices = @transform_2, window_bounds = array<i64: 16, 32>}, {transform_indices = @transform_3, window_bounds = array<i64: 8, 1>}, {transform_indices = @transform_4, window_bounds = array<i64: 8, 1>}, {transform_indices = @transform_5, window_bounds = array<i64: 8, 1>}]} {
    %c0_i32 = arith.constant 0 : i32
    %0 = arith.cmpi eq, %arg1, %c0_i32 : i32
    %1 = arith.extui %0 : i1 to i32
    %c0_i32_0 = arith.constant 0 : i32
    %2 = arith.cmpi ne, %1, %c0_i32_0 : i32
    scf.if %2 {
      %c0_23 = arith.constant 0 : index
      %c0_24 = arith.constant 0 : index
      %39 = vector.load %arg2[%c0_23, %c0_24] : memref<8x32xf32, #tpu.memory_space<vmem>>, vector<8x32xf32>
      %c0_25 = arith.constant 0 : index
      %c0_26 = arith.constant 0 : index
      %40 = vector.load %arg3[%c0_25, %c0_26] : memref<8x32xf32, #tpu.memory_space<vmem>>, vector<8x32xf32>
      %41 = arith.mulf %39, %39 : vector<8x32xf32>
      %cst_27 = arith.constant dense<0.000000e+00> : vector<8xf32>
      %42 = vector.multi_reduction <add>, %41, %cst_27 [1] : vector<8x32xf32> to vector<8xf32>
      %43 = vector.shape_cast %42 : vector<8xf32> to vector<8x1xf32>
      %cst_28 = arith.constant 1.000000e-24 : f32
      %44 = vector.broadcast %cst_28 : f32 to vector<8x1xf32>
      %45 = arith.maximumf %43, %44 : vector<8x1xf32>
      %46 = math.rsqrt %45 : vector<8x1xf32>
      %47 = vector.broadcast %46 : vector<8x1xf32> to vector<8x32xf32>
      %48 = arith.mulf %39, %47 : vector<8x32xf32>
      %49 = arith.mulf %40, %40 : vector<8x32xf32>
      %cst_29 = arith.constant dense<0.000000e+00> : vector<8xf32>
      %50 = vector.multi_reduction <add>, %49, %cst_29 [1] : vector<8x32xf32> to vector<8xf32>
      %51 = vector.shape_cast %50 : vector<8xf32> to vector<8x1xf32>
      %cst_30 = arith.constant 1.000000e-24 : f32
      %52 = vector.broadcast %cst_30 : f32 to vector<8x1xf32>
      %53 = arith.maximumf %51, %52 : vector<8x1xf32>
      %54 = math.rsqrt %53 : vector<8x1xf32>
      %55 = vector.broadcast %54 : vector<8x1xf32> to vector<8x32xf32>
      %56 = arith.mulf %40, %55 : vector<8x32xf32>
      %57 = arith.mulf %48, %56 : vector<8x32xf32>
      %cst_31 = arith.constant dense<0.000000e+00> : vector<8xf32>
      %58 = vector.multi_reduction <add>, %57, %cst_31 [1] : vector<8x32xf32> to vector<8xf32>
      %59 = vector.shape_cast %58 : vector<8xf32> to vector<8x1xf32>
      %c0_32 = arith.constant 0 : index
      %c0_33 = arith.constant 0 : index
      %60 = vector.load %arg9[%c0_32, %c0_33] : memref<8x1xf32, #tpu.memory_space<vmem>>, vector<8x1xf32>
      tpu.vector_store %arg9[%c0_32, %c0_33], %59 {strides = array<i32>} : memref<8x1xf32, #tpu.memory_space<vmem>>, vector<8x1xf32>,
      %cst_34 = arith.constant 1.000000e+01 : f32
      %61 = vector.broadcast %cst_34 : f32 to vector<8x32xf32>
      %62 = arith.mulf %48, %61 : vector<8x32xf32>
      %63 = arith.truncf %62 : vector<8x32xf32> to vector<8x32xbf16>
      %c0_35 = arith.constant 0 : index
      %c0_36 = arith.constant 0 : index
      %64 = vector.load %arg8[%c0_35, %c0_36] : memref<8x32xbf16, #tpu.memory_space<vmem>>, vector<8x32xbf16>
      tpu.vector_store %arg8[%c0_35, %c0_36], %63 {strides = array<i32>} : memref<8x32xbf16, #tpu.memory_space<vmem>>, vector<8x32xbf16>,
      %cst_37 = arith.constant 1.000000e+01 : f32
      %65 = vector.broadcast %cst_37 : f32 to vector<8x1xf32>
      %66 = arith.mulf %59, %65 : vector<8x1xf32>
      %c0_38 = arith.constant 0 : index
      %c0_39 = arith.constant 0 : index
      %67 = vector.load %arg10[%c0_38, %c0_39] : memref<8x1xf32, #tpu.memory_space<vmem>>, vector<8x1xf32>
      tpu.vector_store %arg10[%c0_38, %c0_39], %66 {strides = array<i32>} : memref<8x1xf32, #tpu.memory_space<vmem>>, vector<8x1xf32>,
      %cst_40 = arith.constant 1.000000e+00 : f32
      %68 = vector.broadcast %cst_40 : f32 to vector<8x1xf32>
      %c0_41 = arith.constant 0 : index
      %c0_42 = arith.constant 0 : index
      %69 = vector.load %arg11[%c0_41, %c0_42] : memref<8x1xf32, #tpu.memory_space<vmem>>, vector<8x1xf32>
      tpu.vector_store %arg11[%c0_41, %c0_42], %68 {strides = array<i32>} : memref<8x1xf32, #tpu.memory_space<vmem>>, vector<8x1xf32>,
      %cst_43 = arith.constant 0.000000e+00 : f32
      %70 = vector.broadcast %cst_43 : f32 to vector<1x32xf32>
      %c0_44 = arith.constant 0 : index
      %c0_45 = arith.constant 0 : index
      %71 = vector.load %arg12[%c0_44, %c0_45] : memref<1x32xf32, #tpu.memory_space<vmem>>, vector<1x32xf32>
      tpu.vector_store %arg12[%c0_44, %c0_45], %70 {strides = array<i32>} : memref<1x32xf32, #tpu.memory_space<vmem>>, vector<1x32xf32>,
    } else {
    }
    %c0 = arith.constant 0 : index
    %c0_1 = arith.constant 0 : index
    %3 = vector.load %arg4[%c0, %c0_1] : memref<16x32xf32, #tpu.memory_space<vmem>>, vector<16x32xf32>
    %4 = arith.mulf %3, %3 : vector<16x32xf32>
    %cst = arith.constant dense<0.000000e+00> : vector<16xf32>
    %5 = vector.multi_reduction <add>, %4, %cst [1] : vector<16x32xf32> to vector<16xf32>
    %6 = vector.shape_cast %5 : vector<16xf32> to vector<16x1xf32>
    %cst_2 = arith.constant 1.000000e-24 : f32
    %7 = vector.broadcast %cst_2 : f32 to vector<16x1xf32>
    %8 = arith.maximumf %6, %7 : vector<16x1xf32>
    %9 = math.rsqrt %8 : vector<16x1xf32>
    %10 = vector.broadcast %9 : vector<16x1xf32> to vector<16x32xf32>
    %11 = arith.mulf %3, %10 : vector<16x32xf32>
    %c0_3 = arith.constant 0 : index
    %c0_4 = arith.constant 0 : index
    %12 = vector.load %arg12[%c0_3, %c0_4] : memref<1x32xf32, #tpu.memory_space<vmem>>, vector<1x32xf32>
    %cst_5 = arith.constant dense<0.000000e+00> : vector<32xf32>
    %13 = vector.multi_reduction <add>, %11, %cst_5 [0] : vector<16x32xf32> to vector<32xf32>
    %14 = vector.shape_cast %13 : vector<32xf32> to vector<1x32xf32>
    %15 = arith.addf %12, %14 : vector<1x32xf32>
    %c0_6 = arith.constant 0 : index
    %c0_7 = arith.constant 0 : index
    %16 = vector.load %arg12[%c0_6, %c0_7] : memref<1x32xf32, #tpu.memory_space<vmem>>, vector<1x32xf32>
    tpu.vector_store %arg12[%c0_6, %c0_7], %15 {strides = array<i32>} : memref<1x32xf32, #tpu.memory_space<vmem>>, vector<1x32xf32>,
    %c0_8 = arith.constant 0 : index
    %c0_9 = arith.constant 0 : index
    %17 = vector.load %arg8[%c0_8, %c0_9] : memref<8x32xbf16, #tpu.memory_space<vmem>>, vector<8x32xbf16>
    %18 = arith.truncf %11 : vector<16x32xf32> to vector<16x32xbf16>
    %cst_10 = arith.constant dense<0.000000e+00> : vector<8x16xf32>
    %19 = tpu.matmul %17, %18, %cst_10 {dimension_numbers = #tpu.dot_dimension_numbers<[1], [1], [0], [0], [0, 0, 1, 0], [], []>} : vector<8x32xbf16>, vector<16x32xbf16>, vector<8x16xf32> -> vector<8x16xf32>
    %c0_11 = arith.constant 0 : index
    %c0_12 = arith.constant 0 : index
    %20 = vector.load %arg10[%c0_11, %c0_12] : memref<8x1xf32, #tpu.memory_space<vmem>>, vector<8x1xf32>
    %cst_13 = arith.constant dense<0xFF800000> : vector<8xf32>
    %21 = vector.multi_reduction <maximumf>, %19, %cst_13 [1] : vector<8x16xf32> to vector<8xf32>
    %22 = vector.shape_cast %21 : vector<8xf32> to vector<8x1xf32>
    %23 = arith.maximumf %20, %22 : vector<8x1xf32>
    %24 = arith.subf %20, %23 : vector<8x1xf32>
    %25 = math.exp %24 : vector<8x1xf32>
    %c0_14 = arith.constant 0 : index
    %c0_15 = arith.constant 0 : index
    %26 = vector.load %arg11[%c0_14, %c0_15] : memref<8x1xf32, #tpu.memory_space<vmem>>, vector<8x1xf32>
    %27 = arith.mulf %25, %26 : vector<8x1xf32>
    %28 = vector.broadcast %23 : vector<8x1xf32> to vector<8x16xf32>
    %29 = arith.subf %19, %28 : vector<8x16xf32>
    %30 = math.exp %29 : vector<8x16xf32>
    %cst_16 = arith.constant dense<0.000000e+00> : vector<8xf32>
    %31 = vector.multi_reduction <add>, %30, %cst_16 [1] : vector<8x16xf32> to vector<8xf32>
    %32 = vector.shape_cast %31 : vector<8xf32> to vector<8x1xf32>
    %33 = arith.addf %27, %32 : vector<8x1xf32>
    %c0_17 = arith.constant 0 : index
    %c0_18 = arith.constant 0 : index
    %34 = vector.load %arg11[%c0_17, %c0_18] : memref<8x1xf32, #tpu.memory_space<vmem>>, vector<8x1xf32>
    tpu.vector_store %arg11[%c0_17, %c0_18], %33 {strides = array<i32>} : memref<8x1xf32, #tpu.memory_space<vmem>>, vector<8x1xf32>,
    %c0_19 = arith.constant 0 : index
    %c0_20 = arith.constant 0 : index
    %35 = vector.load %arg10[%c0_19, %c0_20] : memref<8x1xf32, #tpu.memory_space<vmem>>, vector<8x1xf32>
    tpu.vector_store %arg10[%c0_19, %c0_20], %23 {strides = array<i32>} : memref<8x1xf32, #tpu.memory_space<vmem>>, vector<8x1xf32>,
    %c0_i32_21 = arith.constant 0 : i32
    %36 = arith.cmpi eq, %arg1, %c0_i32_21 : i32
    %37 = arith.extui %36 : i1 to i32
    %c0_i32_22 = arith.constant 0 : i32
    %38 = arith.cmpi ne, %37, %c0_i32_22 : i32
    scf.if %38 {
      %c0_23 = arith.constant 0 : index
      %c0_24 = arith.constant 0 : index
      %39 = vector.load %arg10[%c0_23, %c0_24] : memref<8x1xf32, #tpu.memory_space<vmem>>, vector<8x1xf32>
      %c0_25 = arith.constant 0 : index
      %c0_26 = arith.constant 0 : index
      %40 = vector.load %arg11[%c0_25, %c0_26] : memref<8x1xf32, #tpu.memory_space<vmem>>, vector<8x1xf32>
      %41 = math.log %40 : vector<8x1xf32>
      %42 = arith.addf %39, %41 : vector<8x1xf32>
      %c0_27 = arith.constant 0 : index
      %c0_28 = arith.constant 0 : index
      %43 = vector.load %arg9[%c0_27, %c0_28] : memref<8x1xf32, #tpu.memory_space<vmem>>, vector<8x1xf32>
      %cst_29 = arith.constant 1.000000e+01 : f32
      %44 = vector.broadcast %cst_29 : f32 to vector<8x1xf32>
      %45 = arith.mulf %43, %44 : vector<8x1xf32>
      %46 = arith.subf %42, %45 : vector<8x1xf32>
      %c0_30 = arith.constant 0 : index
      %c0_31 = arith.constant 0 : index
      %47 = vector.load %arg5[%c0_30, %c0_31] : memref<8x1xf32, #tpu.memory_space<vmem>>, vector<8x1xf32>
      tpu.vector_store %arg5[%c0_30, %c0_31], %46 {strides = array<i32>} : memref<8x1xf32, #tpu.memory_space<vmem>>, vector<8x1xf32>,
      %c0_32 = arith.constant 0 : index
      %c0_33 = arith.constant 0 : index
      %48 = vector.load %arg9[%c0_32, %c0_33] : memref<8x1xf32, #tpu.memory_space<vmem>>, vector<8x1xf32>
      %c0_34 = arith.constant 0 : index
      %c0_35 = arith.constant 0 : index
      %49 = vector.load %arg6[%c0_34, %c0_35] : memref<8x1xf32, #tpu.memory_space<vmem>>, vector<8x1xf32>
      tpu.vector_store %arg6[%c0_34, %c0_35], %48 {strides = array<i32>} : memref<8x1xf32, #tpu.memory_space<vmem>>, vector<8x1xf32>,
      %c0_36 = arith.constant 0 : index
      %c0_37 = arith.constant 0 : index
      %50 = vector.load %arg8[%c0_36, %c0_37] : memref<8x32xbf16, #tpu.memory_space<vmem>>, vector<8x32xbf16>
      %51 = arith.extf %50 : vector<8x32xbf16> to vector<8x32xf32>
      %c0_38 = arith.constant 0 : index
      %c0_39 = arith.constant 0 : index
      %52 = vector.load %arg12[%c0_38, %c0_39] : memref<1x32xf32, #tpu.memory_space<vmem>>, vector<1x32xf32>
      %53 = vector.broadcast %52 : vector<1x32xf32> to vector<8x32xf32>
      %54 = arith.mulf %51, %53 : vector<8x32xf32>
      %cst_40 = arith.constant dense<0.000000e+00> : vector<8xf32>
      %55 = vector.multi_reduction <add>, %54, %cst_40 [1] : vector<8x32xf32> to vector<8xf32>
      %56 = vector.shape_cast %55 : vector<8xf32> to vector<8x1xf32>
      %cst_41 = arith.constant 1.000000e-01 : f32
      %57 = vector.broadcast %cst_41 : f32 to vector<8x1xf32>
      %58 = arith.mulf %56, %57 : vector<8x1xf32>
      %c0_42 = arith.constant 0 : index
      %c0_43 = arith.constant 0 : index
      %59 = vector.load %arg7[%c0_42, %c0_43] : memref<8x1xf32, #tpu.memory_space<vmem>>, vector<8x1xf32>
      tpu.vector_store %arg7[%c0_42, %c0_43], %58 {strides = array<i32>} : memref<8x1xf32, #tpu.memory_space<vmem>>, vector<8x1xf32>,
    } else {
    }
    return
  }
  func.func @transform_0(%arg0: i32, %arg1: i32) -> (i32, i32) {
    %c0_i32 = arith.constant 0 : i32
    %c0_i32_0 = arith.constant 0 : i32
    return %arg0, %c0_i32 : i32, i32
  }
  func.func @transform_1(%arg0: i32, %arg1: i32) -> (i32, i32) {
    %c0_i32 = arith.constant 0 : i32
    %c0_i32_0 = arith.constant 0 : i32
    return %arg0, %c0_i32 : i32, i32
  }
  func.func @transform_2(%arg0: i32, %arg1: i32) -> (i32, i32) {
    %c0_i32 = arith.constant 0 : i32
    %c0_i32_0 = arith.constant 0 : i32
    return %arg1, %c0_i32 : i32, i32
  }
  func.func @transform_3(%arg0: i32, %arg1: i32) -> (i32, i32) {
    %c0_i32 = arith.constant 0 : i32
    %c0_i32_0 = arith.constant 0 : i32
    return %arg0, %c0_i32 : i32, i32
  }
  func.func @transform_4(%arg0: i32, %arg1: i32) -> (i32, i32) {
    %c0_i32 = arith.constant 0 : i32
    %c0_i32_0 = arith.constant 0 : i32
    return %arg0, %c0_i32 : i32, i32
  }
  func.func @transform_5(%arg0: i32, %arg1: i32) -> (i32, i32) {
    %c0_i32 = arith.constant 0 : i32
    %c0_i32_0 = arith.constant 0 : i32
    return %arg0, %c0_i32 : i32, i32
  }
}

</mosaic_0001>

<llo_original>
// kernel: info_nce_pallas.1
$region0: #{info_nce_pallas.1}
  #allocation0 [shape = 'u32[]', space=smem, size = 0x4, offset = 0x4, fixed_abs, tag = 'smem constant byte address 0x4 - core index']
  #allocation1 [shape = 'u32[144,128]{1,0:T(1,128)}', space=vmem, size = 0x12000, scoped, tag = 'internal scratch']
  #allocation2 [shape = 'bf16[8,32]{1,0:T(8,128)(2,1)}', space=vmem, size = 0x800, scoped, tag = 'scratch operand']
  #allocation3 [shape = 'f32[8,1]{1,0:T(8,128)}', space=vmem, size = 0x1000, scoped, tag = 'scratch operand']
  #allocation4 [shape = 'f32[8,1]{1,0:T(8,128)}', space=vmem, size = 0x1000, scoped, tag = 'scratch operand']
  #allocation5 [shape = 'f32[8,1]{1,0:T(8,128)}', space=vmem, size = 0x1000, scoped, tag = 'scratch operand']
  #allocation6 [shape = 'f32[1,32]{1,0:T(1,128)}', space=vmem, size = 0x200, scoped, tag = 'scratch operand']
  %s0 = inlined_call_operand.hbm [shape: f32[8,32], index: 0, kind: input, shape index: {}]
  %s1 = inlined_call_operand.hbm [shape: f32[8,32], index: 1, kind: input, shape index: {}]
  %s2 = inlined_call_operand.hbm [shape: f32[16,32], index: 2, kind: input, shape index: {}]
  %s3 = inlined_call_operand.vmem [shape: f32[8,1], index: 3, kind: output, shape index: {0}]
  %s4 = inlined_call_operand.vmem [shape: f32[8,1], index: 4, kind: output, shape index: {1}]
  %s5 = inlined_call_operand.vmem [shape: f32[8,1], index: 5, kind: output, shape index: {2}]
  %6 = xla_tuple %s3, %s4, %s5
  %s7 = sld [smem:[#allocation0]]
  $region58: #{info_nce_pallas.1} parent=0
    _
  %s9 = ssub.s32 1, %s7
  %s10 = scalar_select 0, %s9, %s7
  $region1: #{info_nce_pallas.1} parent=0
    #allocation7 [shape = 'u8[4096]{0}', space=vmem, size = 0x1000, scoped, tag = 'input window, operand 0, single buffered']
    #allocation8 [shape = 's32[1]{0}', space=sflag, size = 0x4, scoped, tag = 'scoped memory for info_nce_pallas.1']
    #allocation9 [shape = 'u8[4096]{0}', space=vmem, size = 0x1000, scoped, tag = 'input window, operand 1, single buffered']
    #allocation10 [shape = 's32[1]{0}', space=sflag, size = 0x4, scoped, tag = 'scoped memory for info_nce_pallas.1']
    #allocation11 [shape = 'u8[8192]{0}', space=vmem, size = 0x2000, scoped, tag = 'input window, operand 2, single buffered']
    %11 = vsyncpa [#allocation8], 0
    %12 = vsyncpa [#allocation10], 0
    // Predicated region
    $region2: #{info_nce_pallas.1} parent=1 // pred_check
      _
    $region3: #{info_nce_pallas.1} parent=1 // pred_check_branch
      %14 = sbr.rel (0) target = $region5
    $region4: #{info_nce_pallas.1} parent=1 // pred_region
      %s16 = ssub.s32 128, 128
      %17 = vsyncadd [#allocation8], %s16
      %s19 = sshll.u32 [#allocation7], 4
      %s20 = int_to_ptr.vmem [resolvable:$true] %s19
      %22 = dma.hbm_to_vmem [thread:$0]  %s0, 128, %s20, [#allocation8]
    $region5: #{info_nce_pallas.1} parent=1 // pred_fallthru
      _
    // Predicated region
    $region6: #{info_nce_pallas.1} parent=1 // pred_check
      _
    $region7: #{info_nce_pallas.1} parent=1 // pred_check_branch
      %24 = sbr.rel (0) target = $region9
    $region8: #{info_nce_pallas.1} parent=1 // pred_region
      %s26 = ssub.s32 128, 128
      %27 = vsyncadd [#allocation10], %s26
      %s29 = sshll.u32 [#allocation9], 4
      %s30 = int_to_ptr.vmem [resolvable:$true] %s29
      %32 = dma.hbm_to_vmem [thread:$0]  %s1, 128, %s30, [#allocation10]
    $region9: #{info_nce_pallas.1} parent=1 // pred_fallthru
      _
    // Predicated region
    $region10: #{info_nce_pallas.1} parent=1 // pred_check
      _
    $region11: #{info_nce_pallas.1} parent=1 // pred_check_branch
      %34 = sbr.rel (0) target = $region13
    $region12: #{info_nce_pallas.1} parent=1 // pred_region
      %s36 = ssub.s32 256, 256
      %37 = vsyncadd [#allocation10], %s36
      %s38 = sshll.u32 [#allocation11], 4
      %s39 = int_to_ptr.vmem [resolvable:$true] %s38
      %44 = dma.hbm_to_vmem [thread:$0]  %s2, 256, %s39, [#allocation10], 128, 128, 8
    $region13: #{info_nce_pallas.1} parent=1 // pred_fallthru
      _
    // Predicated region
    $region14: #{info_nce_pallas.1} parent=1 // pred_check
      _
    $region15: #{info_nce_pallas.1} parent=1 // pred_check_branch
      %46 = sbr.rel (0) target = $region17
    $region16: #{info_nce_pallas.1} parent=1 // pred_region
      %47 = dma.done [#allocation8], 128
    $region17: #{info_nce_pallas.1} parent=1 // pred_fallthru
      _
    // Predicated region
    $region18: #{info_nce_pallas.1} parent=1 // pred_check
      _
    $region19: #{info_nce_pallas.1} parent=1 // pred_check_branch
      %49 = sbr.rel (0) target = $region21
    $region20: #{info_nce_pallas.1} parent=1 // pred_region
      %50 = dma.done [#allocation10], 128
    $region21: #{info_nce_pallas.1} parent=1 // pred_fallthru
      _
    // Predicated region
    $region22: #{info_nce_pallas.1} parent=1 // pred_check
      _
    $region23: #{info_nce_pallas.1} parent=1 // pred_check_branch
      %52 = sbr.rel (0) target = $region25
    $region24: #{info_nce_pallas.1} parent=1 // pred_region
      %53 = dma.done [#allocation10], 256
    $region25: #{info_nce_pallas.1} parent=1 // pred_fallthru
      _
    %p55 = scmp.eq.s32.totalorder 0, 0
    // Predicated region
    $region26: #{info_nce_pallas.1} parent=1 // pred_check
      %p56 = pneg %p55
    $region27: #{info_nce_pallas.1} parent=1 // pred_check_branch
      %58 = sbr.rel (%p56) target = $region29
    $region28: #{info_nce_pallas.1} parent=1 // pred_region
      %v59 = vld [vmem:[#allocation7] sm:$0xff]
      %v60 = vld [vmem:[#allocation9] sm:$0xff]
      %v61 = vmul.f32 %v59, %v59
      %vm62 = vcmask 261120
      %v63 = vsel %vm62, %v61, 0.0
      %64 = vadd.xlane.f32.xlu0 %v63
      %v65 = vpop.xlane.xlu0 %64
      %v66 = vmax.f32 %v65, 1e-24
      %v67 = vrsqrt.pop %v66
      %v68 = vmul.f32 %v59, %v67
      %v69 = vmul.f32 %v60, %v60
      %v70 = vsel %vm62, %v69, 0.0
      %71 = vadd.xlane.f32.xlu0 %v70
      %v72 = vpop.xlane.xlu0 %71
      %v73 = vmax.f32 %v72, 1e-24
      %v74 = vrsqrt.pop %v73
      %v75 = vmul.f32 %v60, %v74
      %v76 = vmul.f32 %v68, %v75
      %v77 = vsel %vm62, %v76, 0.0
      %78 = vadd.xlane.f32.xlu0 %v77
      %v79 = vpop.xlane.xlu0 %78
      %vm80 = vcmask 7168
      %81 = vst.msk [vmem:[#allocation3] sm:$0xff] %vm80, %v79
      %v82 = vmul.f32 %v68, 10.0
      %v83 = vpack.c.bf16 %v82, %v82
      %vm84 = vcmask 257024
      %85 = vst.msk [vmem:[#allocation2] sm:$0xf] %vm84, %v83
      %v86 = vmul.f32 %v79, 10.0
      %87 = vst.msk [vmem:[#allocation4] sm:$0xff] %vm80, %v86
      %88 = vst.msk [vmem:[#allocation5] sm:$0xff] %vm80, 1.0
      %vm89 = vcmask 253952
      %90 = vst.msk [vmem:[#allocation6] sm:$0x1] %vm89, 0.0
    $region29: #{info_nce_pallas.1} parent=1 // pred_fallthru
      _
    %v91 = vld [vmem:[#allocation11] sm:$0xff]
    %v92 = vld [vmem:[#allocation11 + $0x8] sm:$0xff]
    %v93 = vmul.f32 %v91, %v91
    %v94 = vmul.f32 %v92, %v92
    %vm95 = vcmask 261120
    %v96 = vsel %vm95, %v93, 0.0
    %97 = vadd.xlane.f32.xlu0 %v96
    %v98 = vpop.xlane.xlu0 %97
    %v99 = vsel %vm95, %v94, 0.0
    %100 = vadd.xlane.f32.xlu0 %v99
    %v101 = vpop.xlane.xlu0 %100
    %v102 = vmax.f32 %v98, 1e-24
    %v103 = vmax.f32 %v101, 1e-24
    %v104 = vrsqrt.pop %v102
    %v105 = vrsqrt.pop %v103
    %v106 = vmul.f32 %v91, %v104
    %v107 = vmul.f32 %v92, %v105
    %v108 = vld [vmem:[#allocation6] sm:$0x1]
    %v109 = vsel %vm95, %v106, 0.0
    %v110 = vsel %vm95, %v107, 0.0
    %v111 = vadd.f32 %v109, %v110
    %v112 = vrot.slane %v111, 4
    %v113 = vadd.f32 %v111, %v112
    %v114 = vrot.slane %v113, 2
    %v115 = vadd.f32 %v113, %v114
    %v116 = vrot.slane %v115, 1
    %v117 = vadd.f32 %v115, %v116
    %v118 = vadd.f32 %v108, %v117
    %vm119 = vcmask 253952
    %120 = vst.msk [vmem:[#allocation6] sm:$0x1] %vm119, %v118
    %v121 = vld [vmem:[#allocation2] sm:$0xf]
    %v122 = vpack.c.bf16 %v107, %v106
    %v124 = vsel %vm95, %v121, 0
    %v127 = vsel %vm95, %v122, 0
    %129 = vmatprep.subr.bf16.mxu0 0
    %130 = vmatpush1.bf16.xpose.msra.mxu0 %v127
    %131 = vmatprep.subr.bf16.mxu0 0
    %132 = vmatpush1.bf16.xpose.msra.mxu0 0
    %133 = vmatprep.subr.bf16.mxu0 0
    %134 = vmatpush1.bf16.xpose.msra.mxu0 0
    %135 = vmatprep.subr.bf16.mxu0 0
    %136 = vmatpush1.bf16.xpose.msra.mxu0 0
    %137 = vmatprep.subr.bf16.mxu0 0
    %138 = vmatpush1.bf16.xpose.msra.mxu0 0
    %139 = vmatprep.subr.bf16.mxu0 0
    %140 = vmatpush1.bf16.xpose.msra.mxu0 0
    %141 = vmatprep.subr.bf16.mxu0 0
    %142 = vmatpush1.bf16.xpose.msra.mxu0 0
    %143 = vmatprep.subr.bf16.mxu0 0
    %144 = vmatpush1.bf16.xpose.msra.mxu0 0
    %145 = vmatprep.subr.bf16.mxu0 0
    %146 = vmatpush1.bf16.xpose.msra.mxu0 0
    %147 = vmatprep.subr.bf16.mxu0 0
    %148 = vmatpush1.bf16.xpose.msra.mxu0 0
    %149 = vmatprep.subr.bf16.mxu0 0
    %150 = vmatpush1.bf16.xpose.msra.mxu0 0
    %151 = vmatprep.subr.bf16.mxu0 0
    %152 = vmatpush1.bf16.xpose.msra.mxu0 0
    %153 = vmatprep.subr.bf16.mxu0 0
    %154 = vmatpush1.bf16.xpose.msra.mxu0 0
    %155 = vmatprep.subr.bf16.mxu0 0
    %156 = vmatpush1.bf16.xpose.msra.mxu0 0
    %157 = vmatprep.subr.bf16.mxu0 0
    %158 = vmatpush1.bf16.xpose.msra.mxu0 0
    %159 = vmatprep.subr.bf16.mxu0 0
    %160 = vmatpush1.bf16.xpose.msra.mxu0 0
    %161 = vmatprep.mubr.bf16.mxu0 0
    %162 = vmatmul.mubr.bf16.gmra.mrb[0].mxu0 %v124
    %v163 = vpop.f32.mrb[0].mxu0
    %v164 = vadd.f32 0.0, %v163
    %v165 = vpop.f32.mrb[0].mxu0
    %v166 = vpop.f32.mrb[0].mxu0
    %v167 = vpop.f32.mrb[0].mxu0
    %168 = vdwg.mxu0
    %v169 = vld [vmem:[#allocation4] sm:$0xff]
    %vm170 = vcmask 130048
    %v171 = vsel %vm170, %v164, -inf
    %172 = vmax.xlane.f32.xlu0 %v171
    %v173 = vpop.xlane.xlu0 %172
    %v174 = vmax.f32 %v169, %v173
    %v175 = vsub.f32 %v169, %v174
    %v176 = vmul.f32 %v175, 1.442695
    %v177 = vpow.pop %v176
    %v178 = vld [vmem:[#allocation5] sm:$0xff]
    %v179 = vmul.f32 %v177, %v178
    %181 = vset.pattern.permute.xlu0 0
    %182 = vperm.xlu0 %181, %v174
    %v183 = vpop.permute.xlu0 %182
    %v185 = vsub.f32 %v164, %v183
    %v186 = vmul.f32 %v185, 1.442695
    %v187 = vpow.pop %v186
    %v188 = vsel %vm170, %v187, 0.0
    %189 = vadd.xlane.f32.xlu0 %v188
    %v190 = vpop.xlane.xlu0 %189
    %v191 = vadd.f32 %v179, %v190
    %vm192 = vcmask 7168
    %193 = vst.msk [vmem:[#allocation5] sm:$0xff] %vm192, %v191
    %194 = vst.msk [vmem:[#allocation4] sm:$0xff] %vm192, %v174
    // Predicated region
    $region30: #{info_nce_pallas.1} parent=1 // pred_check
      %p195 = pneg %p55
    $region31: #{info_nce_pallas.1} parent=1 // pred_check_branch
      %197 = sbr.rel (%p195) target = $region33
    $region32: #{info_nce_pallas.1} parent=1 // pred_region
      %v198 = vld [vmem:[#allocation4] sm:$0xff]
      %v199 = vld [vmem:[#allocation5] sm:$0xff]
      %v200 = vlog2.pop %v199
      %v201 = vmul.f32 %v200, 0.6931472
      %v202 = vadd.f32 %v198, %v201
      %v203 = vld [vmem:[#allocation3] sm:$0xff]
      %v204 = vmul.f32 %v203, 10.0
      %v205 = vsub.f32 %v202, %v204
      %206 = vst.msk [vmem:[%s3] sm:$0xff] %vm192, %v205
      %v207 = vld [vmem:[#allocation3] sm:$0xff]
      %208 = vst.msk [vmem:[%s4] sm:$0xff] %vm192, %v207
      %v209 = vld [vmem:[#allocation2] sm:$0xf]
      %v210 = vunpack.c.l.bf16 %v209
      %v211 = vld [vmem:[#allocation6] sm:$0x1]
      %v213 = vlaneseq
      %v214 = vshrl.u32 %v213, 7
      %v215 = vsub.s32 0, %v214
      %v216 = vrot.slane %v211, %v215
      %v218 = vmul.f32 %v210, %v216
      %v219 = vsel %vm95, %v218, 0.0
      %220 = vadd.xlane.f32.xlu0 %v219
      %v221 = vpop.xlane.xlu0 %220
      %v222 = vmul.f32 %v221, 0.1
      %223 = vst.msk [vmem:[%s5] sm:$0xff] %vm192, %v222
    $region33: #{info_nce_pallas.1} parent=1 // pred_fallthru
      _
    // Predicated region
    $region34: #{info_nce_pallas.1} parent=1 // pred_check
      _
    $region35: #{info_nce_pallas.1} parent=1 // pred_check_branch
      %225 = sbr.rel (0) target = $region37
    $region36: #{info_nce_pallas.1} parent=1 // pred_region
      _
    $region37: #{info_nce_pallas.1} parent=1 // pred_fallthru
      _
    // Predicated region
    $region38: #{info_nce_pallas.1} parent=1 // pred_check
      _
    $region39: #{info_nce_pallas.1} parent=1 // pred_check_branch
      %227 = sbr.rel (0) target = $region41
    $region40: #{info_nce_pallas.1} parent=1 // pred_region
      _
    $region41: #{info_nce_pallas.1} parent=1 // pred_fallthru
      _
    // Predicated region
    $region42: #{info_nce_pallas.1} parent=1 // pred_check
      _
    $region43: #{info_nce_pallas.1} parent=1 // pred_check_branch
      %229 = sbr.rel (0) target = $region45
    $region44: #{info_nce_pallas.1} parent=1 // pred_region
      _
    $region45: #{info_nce_pallas.1} parent=1 // pred_fallthru
      _
    // Predicated region
    $region46: #{info_nce_pallas.1} parent=1 // pred_check
      _
    $region47: #{info_nce_pallas.1} parent=1 // pred_check_branch
      %231 = sbr.rel (0) target = $region49
    $region48: #{info_nce_pallas.1} parent=1 // pred_region
      _
    $region49: #{info_nce_pallas.1} parent=1 // pred_fallthru
      _
    // Predicated region
    $region50: #{info_nce_pallas.1} parent=1 // pred_check
      _
    $region51: #{info_nce_pallas.1} parent=1 // pred_check_branch
      %233 = sbr.rel (0) target = $region53
    $region52: #{info_nce_pallas.1} parent=1 // pred_region
      _
    $region53: #{info_nce_pallas.1} parent=1 // pred_fallthru
      _
    // Predicated region
    $region54: #{info_nce_pallas.1} parent=1 // pred_check
      _
    $region55: #{info_nce_pallas.1} parent=1 // pred_check_branch
      %235 = sbr.rel (0) target = $region57
    $region56: #{info_nce_pallas.1} parent=1 // pred_region
      _
    $region57: #{info_nce_pallas.1} parent=1 // pred_fallthru
      _
    %236 = vsyncpa [#allocation8], 1
    %237 = vsyncpa [#allocation10], 1

</llo_original>
